<compile_context>
chip_gen: v6e
topology: v6e:2x2x1
jax: 0.10.0
libtpu: 0.0.40
codegen_flags: <defaults>
</compile_context>

<pallas_src>
import jax
import jax.numpy as jnp
from jax import lax
from jax.experimental import pallas as pl
from jax.experimental.pallas import tpu as pltpu


# ---------------------------------------------------------------------------
# helpers
# ---------------------------------------------------------------------------

def _round_up(v, m):
    return (v + m - 1) // m * m


def _pick_tile(n_pad, pref, base=256):
    """Largest multiple of `base` that divides n_pad and is <= pref."""
    m = n_pad // base
    best = base
    for d in range(1, m + 1):
        if m % d == 0 and base * d <= pref:
            best = base * d
    return best


def _vmem_capacity_bytes():
    try:
        return int(pltpu.get_tpu_info().vmem_capacity_bytes)
    except Exception:  # pragma: no cover - defensive fallback
        return 64 << 20  # conservative (v7x per-TC VMEM)


# ---------------------------------------------------------------------------
# kernel
# ---------------------------------------------------------------------------

def _make_gcn_kernel(compute_dtype, has_bias):
    def kernel(*refs):
        if has_bias:
            adj_ref, x_ref, w_ref, b_ref, o_ref, acc_ref = refs
        else:
            adj_ref, x_ref, w_ref, o_ref, acc_ref = refs

        k = pl.program_id(1)

        @pl.when(k == 0)
        def _():
            if has_bias:
                # fold the bias into the accumulator init (saves a VPU add +
                # a pl.when body in the finalize branch)
                acc_ref[...] = jnp.broadcast_to(
                    b_ref[...].astype(jnp.float32), acc_ref.shape)
            else:
                acc_ref[...] = jnp.zeros_like(acc_ref)

        # support tile = x[k-block] @ W   (f32 MXU accumulation)
        support = jnp.dot(x_ref[...], w_ref[...],
                          preferred_element_type=jnp.float32)
        # out[i-block] += adj[i-block, k-block] @ support
        # adj is upcast per-tile in-kernel (VPU has huge slack here), so the
        # wrapper never materializes a second N^2 copy of adj in HBM.
        acc_ref[...] += jnp.dot(adj_ref[...].astype(compute_dtype),
                                support.astype(compute_dtype),
                                preferred_element_type=jnp.float32)

        @pl.when(k == pl.num_programs(1) - 1)
        def _():
            o_ref[...] = acc_ref[...].astype(o_ref.dtype)

    return kernel


# ---------------------------------------------------------------------------
# public wrapper (matches GraphConvolution.forward semantics)
# ---------------------------------------------------------------------------

def graph_convolution(x, adj, weight, bias=None, *,
                      compute_dtype=jnp.bfloat16,
                      tm=512, tk=1024):
    """Pallas implementation of GraphConvolution.forward.

    x:      [N, F_in]
    adj:    [N, N] dense adjacency (f32 / bf16 / int8 0-1 mask; spmm is dense)
    weight: [F_in, F_out]
    bias:   [F_out] or None
    returns [N, F_out] in x.dtype
    """
    n, f_in = x.shape
    f_out = weight.shape[1]
    assert adj.shape == (n, n), "adj must be a dense (N, N) adjacency"
    out_dtype = x.dtype

    # --- tile selection: multiples of 256 so the v6e/v7x 2x256x256 MXU is
    # --- full; ragged N is padded to a 256 multiple and tiles divide n_pad.
    base = 256
    tm = max(base, int(tm))
    tk = max(base, int(tk))
    n_pad = _round_up(n, base)
    tm_eff = _pick_tile(n_pad, tm, base)
    tk_eff = _pick_tile(n_pad, tk, base)

    adj_isz = jnp.dtype(adj.dtype).itemsize
    c_isz = jnp.dtype(compute_dtype).itemsize
    o_isz = jnp.dtype(out_dtype).itemsize

    def vmem_need(tm_, tk_):
        return (2 * tm_ * tk_ * adj_isz        # adj tile (double-buffered)
                + 2 * tk_ * f_in * c_isz       # x tile  (double-buffered)
                + 2 * f_in * f_out * c_isz     # W (VMEM resident)
                + 2 * tm_ * f_out * o_isz      # out tile (double-buffered)
                + tm_ * f_out * 4              # f32 accumulator scratch
                + 2 * f_out * 4)               # bias

    # generation-aware VMEM fit (v7x has 64 MiB vs 128 MiB on v5e/v6e)
    cap = _vmem_capacity_bytes()
    budget = max(cap // 2, 16 << 20)
    while vmem_need(tm_eff, tk_eff) > budget and tk_eff > base:
        tk_eff = _pick_tile(n_pad, tk_eff // 2, base)
    while vmem_need(tm_eff, tk_eff) > budget and tm_eff > base:
        tm_eff = _pick_tile(n_pad, tm_eff // 2, base)

    # --- operand prep: x / W cast once (O(N*F_in), cheap); adj streamed as-is.
    x_c = x.astype(compute_dtype)
    w_c = weight.astype(compute_dtype)
    adj_in = adj
    if n_pad != n:
        pad = n_pad - n
        x_c = jnp.pad(x_c, ((0, pad), (0, 0)))
        adj_in = jnp.pad(adj_in, ((0, pad), (0, pad)))
    b2d = None if bias is None else bias.astype(jnp.float32).reshape(1, f_out)

    grid = (n_pad // tm_eff, n_pad // tk_eff)
    adj_spec = pl.BlockSpec((tm_eff, tk_eff), lambda i, k: (i, k))
    x_spec = pl.BlockSpec((tk_eff, f_in), lambda i, k: (k, 0))
    w_spec = pl.BlockSpec((f_in, f_out), lambda i, k: (0, 0))
    out_spec = pl.BlockSpec((tm_eff, f_out), lambda i, k: (i, 0))
    scratch = [pltpu.VMEM((tm_eff, f_out), jnp.float32)]

    if b2d is not None:
        in_specs = [adj_spec, x_spec, w_spec,
                    pl.BlockSpec((1, f_out), lambda i, k: (0, 0))]
        args = (adj_in, x_c, w_c, b2d)
    else:
        in_specs = [adj_spec, x_spec, w_spec]
        args = (adj_in, x_c, w_c)

    # cost estimate: spmm + in-kernel support recompute; adj streamed exactly
    # once, x re-streamed n_pad/tm_eff times, support never touches HBM.
    flops = (2 * n_pad * n_pad * f_out
             + 2 * n_pad * n_pad * f_in * f_out // tm_eff)
    bytes_accessed = (n_pad * n_pad * adj_isz
                      + (n_pad // tm_eff) * n_pad * f_in * c_isz
                      + f_in * f_out * c_isz
                      + n_pad * f_out * o_isz)
    if b2d is not None:
        bytes_accessed += f_out * 4

    kernel = _make_gcn_kernel(compute_dtype, b2d is not None)

    out = pl.pallas_call(
        kernel,
        out_shape=jax.ShapeDtypeStruct((n_pad, f_out), out_dtype),
        grid_spec=pltpu.PrefetchScalarGridSpec(
            num_scalar_prefetch=0,
            grid=grid,
            in_specs=in_specs,
            out_specs=out_spec,
            scratch_shapes=scratch,
        ),
        compiler_params=pltpu.CompilerParams(
            dimension_semantics=("parallel", "arbitrary"),
            vmem_limit_bytes=int(min(cap - (8 << 20),
                                     max(2 * vmem_need(tm_eff, tk_eff),
                                         32 << 20))),
        ),
        cost_estimate=pl.CostEstimate(flops=int(flops), transcendentals=0,
                                      bytes_accessed=int(bytes_accessed)),
    )(*args)

    return out[:n] if n_pad != n else out


# ---------------------------------------------------------------------------
# self-test
# ---------------------------------------------------------------------------

if __name__ == "__main__":
    key = jax.random.PRNGKey(0)
    kx, ka, kw, kb, kx2, ka2, kx3, ka3 = jax.random.split(key, 8)

    F_IN, F_OUT = 64, 128
    weight = jax.random.normal(kw, (F_IN, F_OUT), dtype=jnp.float32) * 0.1
    bias = jax.random.normal(kb, (F_OUT,), dtype=jnp.float32) * 0.1

    def reference(x_, adj_, w_, b_):
        xf = x_.astype(jnp.float32)
        af = adj_.astype(jnp.float32)
        wf = w_.astype(jnp.float32)
        s = jnp.dot(xf, wf, precision=lax.Precision.HIGHEST)
        o = jnp.dot(af, s, precision=lax.Precision.HIGHEST)
        return o if b_ is None else o + b_.astype(jnp.float32)

    def check(name, got, want, atol, rtol):
        got32 = got.astype(jnp.float32)
        ok = jnp.allclose(got32, want, atol=atol, rtol=rtol)
        err = float(jnp.max(jnp.abs(got32 - want)))
        assert bool(ok), f"{name}: mismatch, max abs err = {err}"

    # A) small square graph, float32 compute path (no bias) — tight check.
    N = 256
    x = jax.random.normal(kx, (N, F_IN), dtype=jnp.float32)
    adj = (jax.random.uniform(ka, (N, N)) < 0.05).astype(jnp.float32)
    out_a = graph_convolution(x, adj, weight, compute_dtype=jnp.float32)
    jax.block_until_ready(out_a)
    assert out_a.shape == (N, F_OUT)
    check("f32/no-bias", out_a, reference(x, adj, weight, None), 2e-2, 2e-2)

    # B) same graph, default bf16 compute path, with bias.
    out_b = graph_convolution(x, adj, weight, bias=bias)
    jax.block_until_ready(out_b)
    check("bf16/bias", out_b, reference(x, adj, weight, bias), 6e-2, 6e-2)

    # C) ragged N (exercises zero-padding path), bias, bf16.
    N2 = 300
    x2 = jax.random.normal(kx2, (N2, F_IN), dtype=jnp.float32)
    adj2 = (jax.random.uniform(ka2, (N2, N2)) < 0.05).astype(jnp.float32)
    out_c = graph_convolution(x2, adj2, weight, bias=bias)
    jax.block_until_ready(out_c)
    assert out_c.shape == (N2, F_OUT)
    check("bf16/ragged", out_c, reference(x2, adj2, weight, bias), 6e-2, 6e-2)

    # D) larger graph with int8 0/1 adjacency streamed and upcast in-kernel;
    #    multi-block grid exercises the k-accumulation path.
    N3 = 2048
    x3 = jax.random.normal(kx3, (N3, F_IN), dtype=jnp.float32)
    adj3 = (jax.random.uniform(ka3, (N3, N3)) < 0.05).astype(jnp.int8)
    out_d = graph_convolution(x3, adj3, weight, bias=bias)
    jax.block_until_ready(out_d)
    check("bf16/int8-adj", out_d, reference(x3, adj3, weight, bias), 1e-1, 6e-2)

    print("KERNEL_OK")
</pallas_src>

<mosaic_0001>
module attributes {stable_mosaic.version = 11 : i64} {
  func.func @kernel(%arg0: i32, %arg1: i32, %arg2: memref<256x256xf32, #tpu.memory_space<vmem>>, %arg3: memref<256x64xf32, #tpu.memory_space<vmem>>, %arg4: memref<64x128xf32, #tpu.memory_space<vmem>>, %arg5: memref<256x128xf32, #tpu.memory_space<vmem>>, %arg6: memref<256x128xf32, #tpu.memory_space<vmem>>) attributes {dimension_semantics = [#tpu.dimension_semantics<parallel>, #tpu.dimension_semantics<arbitrary>], iteration_bounds = array<i64: 1, 1>, scalar_prefetch = 0 : i64, scratch_operands = 1 : i64, tpu.core_type = #tpu.core_type<tc>, window_params = [{transform_indices = @transform_0, window_bounds = array<i64: 256, 256>}, {transform_indices = @transform_1, window_bounds = array<i64: 256, 64>}, {pipeline_mode = #tpu.pipeline_mode<synchronous>, transform_indices = @transform_2, window_bounds = array<i64: 64, 128>}, {transform_indices = @transform_3, window_bounds = array<i64: 256, 128>}]} {
    %c0_i32 = arith.constant 0 : i32
    %0 = arith.cmpi eq, %arg1, %c0_i32 : i32
    %1 = arith.extui %0 : i1 to i32
    %c0_i32_0 = arith.constant 0 : i32
    %2 = arith.cmpi ne, %1, %c0_i32_0 : i32
    scf.if %2 {
      %cst_13 = arith.constant 0.000000e+00 : f32
      %14 = vector.broadcast %cst_13 : f32 to vector<256x128xf32>
      %c0_14 = arith.constant 0 : index
      %c0_15 = arith.constant 0 : index
      %15 = vector.load %arg6[%c0_14, %c0_15] : memref<256x128xf32, #tpu.memory_space<vmem>>, vector<256x128xf32>
      tpu.vector_store %arg6[%c0_14, %c0_15], %14 {strides = array<i32>} : memref<256x128xf32, #tpu.memory_space<vmem>>, vector<256x128xf32>,
    } else {
    }
    %c0 = arith.constant 0 : index
    %c0_1 = arith.constant 0 : index
    %3 = vector.load %arg3[%c0, %c0_1] : memref<256x64xf32, #tpu.memory_space<vmem>>, vector<256x64xf32>
    %c0_2 = arith.constant 0 : index
    %c0_3 = arith.constant 0 : index
    %4 = vector.load %arg4[%c0_2, %c0_3] : memref<64x128xf32, #tpu.memory_space<vmem>>, vector<64x128xf32>
    %cst = arith.constant dense<0.000000e+00> : vector<256x128xf32>
    %5 = tpu.matmul %3, %4, %cst {dimension_numbers = #tpu.dot_dimension_numbers<[1], [0], [0], [1], [0, 0, 1, 1], [], []>} : vector<256x64xf32>, vector<64x128xf32>, vector<256x128xf32> -> vector<256x128xf32>
    %c0_4 = arith.constant 0 : index
    %c0_5 = arith.constant 0 : index
    %6 = vector.load %arg6[%c0_4, %c0_5] : memref<256x128xf32, #tpu.memory_space<vmem>>, vector<256x128xf32>
    %c0_6 = arith.constant 0 : index
    %c0_7 = arith.constant 0 : index
    %7 = vector.load %arg2[%c0_6, %c0_7] : memref<256x256xf32, #tpu.memory_space<vmem>>, vector<256x256xf32>
    %cst_8 = arith.constant dense<0.000000e+00> : vector<256x128xf32>
    %8 = tpu.matmul %7, %5, %cst_8 {dimension_numbers = #tpu.dot_dimension_numbers<[1], [0], [0], [1], [0, 0, 1, 1], [], []>} : vector<256x256xf32>, vector<256x128xf32>, vector<256x128xf32> -> vector<256x128xf32>
    %9 = arith.addf %6, %8 : vector<256x128xf32>
    %c0_9 = arith.constant 0 : index
    %c0_10 = arith.constant 0 : index
    %10 = vector.load %arg6[%c0_9, %c0_10] : memref<256x128xf32, #tpu.memory_space<vmem>>, vector<256x128xf32>
    tpu.vector_store %arg6[%c0_9, %c0_10], %9 {strides = array<i32>} : memref<256x128xf32, #tpu.memory_space<vmem>>, vector<256x128xf32>,
    %c0_i32_11 = arith.constant 0 : i32
    %11 = arith.cmpi eq, %arg1, %c0_i32_11 : i32
    %12 = arith.extui %11 : i1 to i32
    %c0_i32_12 = arith.constant 0 : i32
    %13 = arith.cmpi ne, %12, %c0_i32_12 : i32
    scf.if %13 {
      %c0_13 = arith.constant 0 : index
      %c0_14 = arith.constant 0 : index
      %14 = vector.load %arg6[%c0_13, %c0_14] : memref<256x128xf32, #tpu.memory_space<vmem>>, vector<256x128xf32>
      %c0_15 = arith.constant 0 : index
      %c0_16 = arith.constant 0 : index
      %15 = vector.load %arg5[%c0_15, %c0_16] : memref<256x128xf32, #tpu.memory_space<vmem>>, vector<256x128xf32>
      tpu.vector_store %arg5[%c0_15, %c0_16], %14 {strides = array<i32>} : memref<256x128xf32, #tpu.memory_space<vmem>>, vector<256x128xf32>,
    } else {
    }
    return
  }
  func.func @transform_0(%arg0: i32, %arg1: i32) -> (i32, i32) {
    %c0_i32 = arith.constant 0 : i32
    return %arg0, %arg1 : i32, i32
  }
  func.func @transform_1(%arg0: i32, %arg1: i32) -> (i32, i32) {
    %c0_i32 = arith.constant 0 : i32
    %c0_i32_0 = arith.constant 0 : i32
    return %arg1, %c0_i32 : i32, i32
  }
  func.func @transform_2(%arg0: i32, %arg1: i32) -> (i32, i32) {
    %c0_i32 = arith.constant 0 : i32
    %c0_i32_0 = arith.constant 0 : i32
    %c0_i32_1 = arith.constant 0 : i32
    return %c0_i32, %c0_i32_0 : i32, i32
  }
  func.func @transform_3(%arg0: i32, %arg1: i32) -> (i32, i32) {
    %c0_i32 = arith.constant 0 : i32
    %c0_i32_0 = arith.constant 0 : i32
    return %arg0, %c0_i32 : i32, i32
  }
}

</mosaic_0001>

<llo_original>
// kernel: tpu_custom_call.1
$region0: #{tpu_custom_call.1}
  #allocation0 [shape = 'u32[]', space=smem, size = 0x4, offset = 0x4, fixed_abs, tag = 'smem constant byte address 0x4 - core index']
  #allocation1 [shape = 'u32[144,128]{1,0:T(1,128)}', space=vmem, size = 0x12000, scoped, tag = 'internal scratch']
  #allocation2 [shape = 'f32[256,128]{1,0:T(8,128)}', space=vmem, size = 0x20000, scoped, tag = 'scratch operand']
  %s0 = inlined_call_operand.hbm [shape: f32[256,256], index: 0, kind: input, shape index: {}]
  %s1 = inlined_call_operand.vmem [shape: f32[256,64], index: 1, kind: input, shape index: {}]
  %s2 = inlined_call_operand.vmem [shape: f32[64,128], index: 2, kind: input, shape index: {}]
  %s3 = inlined_call_operand.hbm [shape: f32[256,128], index: 3, kind: output, shape index: {}]
  %s4 = sld [smem:[#allocation0]]
  $region34: #{tpu_custom_call.1} parent=0
    _
  %s6 = ssub.s32 1, %s4
  %s7 = scalar_select 0, %s6, %s4
  $region1: #{tpu_custom_call.1} parent=0
    #allocation3 [shape = 'u8[262144]{0}', space=vmem, size = 0x40000, scoped, tag = 'input window, operand 0, single buffered']
    #allocation4 [shape = 's32[1]{0}', space=sflag, size = 0x4, scoped, tag = 'scoped memory for tpu_custom_call.1']
    #allocation5 [shape = 's32[1]{0}', space=sflag, size = 0x4, scoped, tag = 'scoped memory for tpu_custom_call.1']
    #allocation6 [shape = 'u8[131072]{0}', space=vmem, size = 0x20000, scoped, tag = 'output window, operand 0, single buffered']
    %8 = vsyncpa [#allocation4], 0
    %9 = vsyncpa [#allocation5], 0
    // Predicated region
    $region2: #{tpu_custom_call.1} parent=1 // pred_check
      _
    $region3: #{tpu_custom_call.1} parent=1 // pred_check_branch
      %11 = sbr.rel (0) target = $region5
    $region4: #{tpu_custom_call.1} parent=1 // pred_region
      %s13 = ssub.s32 8192, 8192
      %14 = vsyncadd [#allocation4], %s13
      %s15 = sshll.u32 [#allocation3], 4
      %s16 = int_to_ptr.vmem [resolvable:$true] %s15
      %21 = dma.hbm_to_vmem [thread:$0]  %s0, 8192, %s16, [#allocation4], 256, 256, 16
    $region5: #{tpu_custom_call.1} parent=1 // pred_fallthru
      _
    // Predicated region
    $region6: #{tpu_custom_call.1} parent=1 // pred_check
      _
    $region7: #{tpu_custom_call.1} parent=1 // pred_check_branch
      %23 = sbr.rel (0) target = $region9
    $region8: #{tpu_custom_call.1} parent=1 // pred_region
      _
    $region9: #{tpu_custom_call.1} parent=1 // pred_fallthru
      _
    // Predicated region
    $region10: #{tpu_custom_call.1} parent=1 // pred_check
      _
    $region11: #{tpu_custom_call.1} parent=1 // pred_check_branch
      %25 = sbr.rel (0) target = $region13
    $region12: #{tpu_custom_call.1} parent=1 // pred_region
      _
    $region13: #{tpu_custom_call.1} parent=1 // pred_fallthru
      _
    // Predicated region
    $region14: #{tpu_custom_call.1} parent=1 // pred_check
      _
    $region15: #{tpu_custom_call.1} parent=1 // pred_check_branch
      %27 = sbr.rel (0) target = $region17
    $region16: #{tpu_custom_call.1} parent=1 // pred_region
      %28 = dma.done [#allocation4], 8192
    $region17: #{tpu_custom_call.1} parent=1 // pred_fallthru
      _
    %p29 = scmp.eq.s32.totalorder 0, 0
    // Predicated region
    $region18: #{tpu_custom_call.1} parent=1 // pred_check
      %p30 = pneg %p29
    $region19: #{tpu_custom_call.1} parent=1 // pred_check_branch
      %32 = sbr.rel (%p30) target = $region21
    $region20: #{tpu_custom_call.1} parent=1 // pred_region
      %33 = vst [vmem:[#allocation2] sm:$0xff] 0.0
      %34 = vst [vmem:[#allocation2 + $0x8] sm:$0xff] 0.0
      %35 = vst [vmem:[#allocation2 + $0x10] sm:$0xff] 0.0
      %36 = vst [vmem:[#allocation2 + $0x18] sm:$0xff] 0.0
      %37 = vst [vmem:[#allocation2 + $0x20] sm:$0xff] 0.0
      %38 = vst [vmem:[#allocation2 + $0x28] sm:$0xff] 0.0
      %39 = vst [vmem:[#allocation2 + $0x30] sm:$0xff] 0.0
      %40 = vst [vmem:[#allocation2 + $0x38] sm:$0xff] 0.0
      %41 = vst [vmem:[#allocation2 + $0x40] sm:$0xff] 0.0
      %42 = vst [vmem:[#allocation2 + $0x48] sm:$0xff] 0.0
      %43 = vst [vmem:[#allocation2 + $0x50] sm:$0xff] 0.0
      %44 = vst [vmem:[#allocation2 + $0x58] sm:$0xff] 0.0
      %45 = vst [vmem:[#allocation2 + $0x60] sm:$0xff] 0.0
      %46 = vst [vmem:[#allocation2 + $0x68] sm:$0xff] 0.0
      %47 = vst [vmem:[#allocation2 + $0x70] sm:$0xff] 0.0
      %48 = vst [vmem:[#allocation2 + $0x78] sm:$0xff] 0.0
      %49 = vst [vmem:[#allocation2 + $0x80] sm:$0xff] 0.0
      %50 = vst [vmem:[#allocation2 + $0x88] sm:$0xff] 0.0
      %51 = vst [vmem:[#allocation2 + $0x90] sm:$0xff] 0.0
      %52 = vst [vmem:[#allocation2 + $0x98] sm:$0xff] 0.0
      %53 = vst [vmem:[#allocation2 + $0xa0] sm:$0xff] 0.0
      %54 = vst [vmem:[#allocation2 + $0xa8] sm:$0xff] 0.0
      %55 = vst [vmem:[#allocation2 + $0xb0] sm:$0xff] 0.0
      %56 = vst [vmem:[#allocation2 + $0xb8] sm:$0xff] 0.0
      %57 = vst [vmem:[#allocation2 + $0xc0] sm:$0xff] 0.0
      %58 = vst [vmem:[#allocation2 + $0xc8] sm:$0xff] 0.0
      %59 = vst [vmem:[#allocation2 + $0xd0] sm:$0xff] 0.0
      %60 = vst [vmem:[#allocation2 + $0xd8] sm:$0xff] 0.0
      %61 = vst [vmem:[#allocation2 + $0xe0] sm:$0xff] 0.0
      %62 = vst [vmem:[#allocation2 + $0xe8] sm:$0xff] 0.0
      %63 = vst [vmem:[#allocation2 + $0xf0] sm:$0xff] 0.0
      %64 = vst [vmem:[#allocation2 + $0xf8] sm:$0xff] 0.0
    $region21: #{tpu_custom_call.1} parent=1 // pred_fallthru
      _
    %v65 = vld [vmem:[%s1] sm:$0xff]
    %v66 = vld [vmem:[%s1 + $0x8] sm:$0xff]
    %v67 = vld [vmem:[%s1 + $0x10] sm:$0xff]
    %v68 = vld [vmem:[%s1 + $0x18] sm:$0xff]
    %v69 = vld [vmem:[%s1 + $0x20] sm:$0xff]
    %v70 = vld [vmem:[%s1 + $0x28] sm:$0xff]
    %v71 = vld [vmem:[%s1 + $0x30] sm:$0xff]
    %v72 = vld [vmem:[%s1 + $0x38] sm:$0xff]
    %v73 = vld [vmem:[%s1 + $0x40] sm:$0xff]
    %v74 = vld [vmem:[%s1 + $0x48] sm:$0xff]
    %v75 = vld [vmem:[%s1 + $0x50] sm:$0xff]
    %v76 = vld [vmem:[%s1 + $0x58] sm:$0xff]
    %v77 = vld [vmem:[%s1 + $0x60] sm:$0xff]
    %v78 = vld [vmem:[%s1 + $0x68] sm:$0xff]
    %v79 = vld [vmem:[%s1 + $0x70] sm:$0xff]
    %v80 = vld [vmem:[%s1 + $0x78] sm:$0xff]
    %v81 = vld [vmem:[%s1 + $0x80] sm:$0xff]
    %v82 = vld [vmem:[%s1 + $0x88] sm:$0xff]
    %v83 = vld [vmem:[%s1 + $0x90] sm:$0xff]
    %v84 = vld [vmem:[%s1 + $0x98] sm:$0xff]
    %v85 = vld [vmem:[%s1 + $0xa0] sm:$0xff]
    %v86 = vld [vmem:[%s1 + $0xa8] sm:$0xff]
    %v87 = vld [vmem:[%s1 + $0xb0] sm:$0xff]
    %v88 = vld [vmem:[%s1 + $0xb8] sm:$0xff]
    %v89 = vld [vmem:[%s1 + $0xc0] sm:$0xff]
    %v90 = vld [vmem:[%s1 + $0xc8] sm:$0xff]
    %v91 = vld [vmem:[%s1 + $0xd0] sm:$0xff]
    %v92 = vld [vmem:[%s1 + $0xd8] sm:$0xff]
    %v93 = vld [vmem:[%s1 + $0xe0] sm:$0xff]
    %v94 = vld [vmem:[%s1 + $0xe8] sm:$0xff]
    %v95 = vld [vmem:[%s1 + $0xf0] sm:$0xff]
    %v96 = vld [vmem:[%s1 + $0xf8] sm:$0xff]
    %v97 = vld [vmem:[%s2] sm:$0xff]
    %v98 = vld [vmem:[%s2 + $0x8] sm:$0xff]
    %v99 = vld [vmem:[%s2 + $0x10] sm:$0xff]
    %v100 = vld [vmem:[%s2 + $0x18] sm:$0xff]
    %v101 = vld [vmem:[%s2 + $0x20] sm:$0xff]
    %v102 = vld [vmem:[%s2 + $0x28] sm:$0xff]
    %v103 = vld [vmem:[%s2 + $0x30] sm:$0xff]
    %v104 = vld [vmem:[%s2 + $0x38] sm:$0xff]
    %vm105 = vcmask 523264
    %v107 = vsel %vm105, %v65, 0
    %v110 = vsel %vm105, %v66, 0
    %v113 = vsel %vm105, %v67, 0
    %v116 = vsel %vm105, %v68, 0
    %v119 = vsel %vm105, %v69, 0
    %v122 = vsel %vm105, %v70, 0
    %v125 = vsel %vm105, %v71, 0
    %v128 = vsel %vm105, %v72, 0
    %v131 = vsel %vm105, %v73, 0
    %v134 = vsel %vm105, %v74, 0
    %v137 = vsel %vm105, %v75, 0
    %v140 = vsel %vm105, %v76, 0
    %v143 = vsel %vm105, %v77, 0
    %v146 = vsel %vm105, %v78, 0
    %v149 = vsel %vm105, %v79, 0
    %v152 = vsel %vm105, %v80, 0
    %v155 = vsel %vm105, %v81, 0
    %v158 = vsel %vm105, %v82, 0
    %v161 = vsel %vm105, %v83, 0
    %v164 = vsel %vm105, %v84, 0
    %v167 = vsel %vm105, %v85, 0
    %v170 = vsel %vm105, %v86, 0
    %v173 = vsel %vm105, %v87, 0
    %v176 = vsel %vm105, %v88, 0
    %v179 = vsel %vm105, %v89, 0
    %v182 = vsel %vm105, %v90, 0
    %v185 = vsel %vm105, %v91, 0
    %v188 = vsel %vm105, %v92, 0
    %v191 = vsel %vm105, %v93, 0
    %v194 = vsel %vm105, %v94, 0
    %v197 = vsel %vm105, %v95, 0
    %v200 = vsel %vm105, %v96, 0
    %202 = vmatprep.subr.mxu0 0.0
    %203 = vmatpush1.msra.mxu0 0.0
    %204 = vmatprep.subr.mxu0 0.0
    %205 = vmatpush1.msra.mxu0 0.0
    %206 = vmatprep.subr.mxu0 0.0
    %207 = vmatpush1.msra.mxu0 0.0
    %208 = vmatprep.subr.mxu0 0.0
    %209 = vmatpush1.msra.mxu0 0.0
    %210 = vmatprep.subr.mxu0 0.0
    %211 = vmatpush1.msra.mxu0 0.0
    %212 = vmatprep.subr.mxu0 0.0
    %213 = vmatpush1.msra.mxu0 0.0
    %214 = vmatprep.subr.mxu0 0.0
    %215 = vmatpush1.msra.mxu0 0.0
    %216 = vmatprep.subr.mxu0 0.0
    %217 = vmatpush1.msra.mxu0 0.0
    %218 = vmatprep.subr.mxu0 0.0
    %219 = vmatpush1.msra.mxu0 %v104
    %220 = vmatprep.subr.mxu0 0.0
    %221 = vmatpush1.msra.mxu0 %v103
    %222 = vmatprep.subr.mxu0 0.0
    %223 = vmatpush1.msra.mxu0 %v102
    %224 = vmatprep.subr.mxu0 0.0
    %225 = vmatpush1.msra.mxu0 %v101
    %226 = vmatprep.subr.mxu0 0.0
    %227 = vmatpush1.msra.mxu0 %v100
    %228 = vmatprep.subr.mxu0 0.0
    %229 = vmatpush1.msra.mxu0 %v99
    %230 = vmatprep.subr.mxu0 0.0
    %231 = vmatpush1.msra.mxu0 %v98
    %232 = vmatprep.subr.mxu0 0.0
    %233 = vmatpush1.msra.mxu0 %v97
    %234 = vmatprep.subr.mxu0 0.0
    %235 = vmatpush2.msra.mxu0 0.0
    %236 = vmatprep.subr.mxu0 0.0
    %237 = vmatpush2.msra.mxu0 0.0
    %238 = vmatprep.subr.mxu0 0.0
    %239 = vmatpush2.msra.mxu0 0.0
    %240 = vmatprep.subr.mxu0 0.0
    %241 = vmatpush2.msra.mxu0 0.0
    %242 = vmatprep.subr.mxu0 0.0
    %243 = vmatpush2.msra.mxu0 0.0
    %244 = vmatprep.subr.mxu0 0.0
    %245 = vmatpush2.msra.mxu0 0.0
    %246 = vmatprep.subr.mxu0 0.0
    %247 = vmatpush2.msra.mxu0 0.0
    %248 = vmatprep.subr.mxu0 0.0
    %249 = vmatpush2.msra.mxu0 0.0
    %250 = vmatprep.subr.mxu0 0.0
    %251 = vmatpush2.msra.mxu0 0.0
    %252 = vmatprep.subr.mxu0 0.0
    %253 = vmatpush2.msra.mxu0 0.0
    %254 = vmatprep.subr.mxu0 0.0
    %255 = vmatpush2.msra.mxu0 0.0
    %256 = vmatprep.subr.mxu0 0.0
    %257 = vmatpush2.msra.mxu0 0.0
    %258 = vmatprep.subr.mxu0 0.0
    %259 = vmatpush2.msra.mxu0 0.0
    %260 = vmatprep.subr.mxu0 0.0
    %261 = vmatpush2.msra.mxu0 0.0
    %262 = vmatprep.subr.mxu0 0.0
    %263 = vmatpush2.msra.mxu0 0.0
    %264 = vmatprep.subr.mxu0 0.0
    %265 = vmatpush2.msra.mxu0 0.0
    %266 = vmatprep.mubr.f32.mxu0 0.0
    %267 = vmatmul.mubr.f32.gmra.mxu0 %v107
    %v268 = vpop.f32.mrf.mxu0
    %v269 = vadd.f32 0.0, %v268
    %v270 = vpop.f32.mrf.mxu0
    %271 = vmatprep.mubr.f32.mxu0 0.0
    %272 = vmatmul.mubr.f32.gmra.mxu0 %v110
    %v273 = vpop.f32.mrf.mxu0
    %v274 = vadd.f32 0.0, %v273
    %v275 = vpop.f32.mrf.mxu0
    %276 = vmatprep.mubr.f32.mxu0 0.0
    %277 = vmatmul.mubr.f32.gmra.mxu0 %v113
    %v278 = vpop.f32.mrf.mxu0
    %v279 = vadd.f32 0.0, %v278
    %v280 = vpop.f32.mrf.mxu0
    %281 = vmatprep.mubr.f32.mxu0 0.0
    %282 = vmatmul.mubr.f32.gmra.mxu0 %v116
    %v283 = vpop.f32.mrf.mxu0
    %v284 = vadd.f32 0.0, %v283
    %v285 = vpop.f32.mrf.mxu0
    %286 = vmatprep.mubr.f32.mxu0 0.0
    %287 = vmatmul.mubr.f32.gmra.mxu0 %v119
    %v288 = vpop.f32.mrf.mxu0
    %v289 = vadd.f32 0.0, %v288
    %v290 = vpop.f32.mrf.mxu0
    %291 = vmatprep.mubr.f32.mxu0 0.0
    %292 = vmatmul.mubr.f32.gmra.mxu0 %v122
    %v293 = vpop.f32.mrf.mxu0
    %v294 = vadd.f32 0.0, %v293
    %v295 = vpop.f32.mrf.mxu0
    %296 = vmatprep.mubr.f32.mxu0 0.0
    %297 = vmatmul.mubr.f32.gmra.mxu0 %v125
    %v298 = vpop.f32.mrf.mxu0
    %v299 = vadd.f32 0.0, %v298
    %v300 = vpop.f32.mrf.mxu0
    %301 = vmatprep.mubr.f32.mxu0 0.0
    %302 = vmatmul.mubr.f32.gmra.mxu0 %v128
    %v303 = vpop.f32.mrf.mxu0
    %v304 = vadd.f32 0.0, %v303
    %v305 = vpop.f32.mrf.mxu0
    %306 = vmatprep.mubr.f32.mxu0 0.0
    %307 = vmatmul.mubr.f32.gmra.mxu0 %v131
    %v308 = vpop.f32.mrf.mxu0
    %v309 = vadd.f32 0.0, %v308
    %v310 = vpop.f32.mrf.mxu0
    %311 = vmatprep.mubr.f32.mxu0 0.0
    %312 = vmatmul.mubr.f32.gmra.mxu0 %v134
    %v313 = vpop.f32.mrf.mxu0
    %v314 = vadd.f32 0.0, %v313
    %v315 = vpop.f32.mrf.mxu0
    %316 = vmatprep.mubr.f32.mxu0 0.0
    %317 = vmatmul.mubr.f32.gmra.mxu0 %v137
    %v318 = vpop.f32.mrf.mxu0
    %v319 = vadd.f32 0.0, %v318
    %v320 = vpop.f32.mrf.mxu0
    %321 = vmatprep.mubr.f32.mxu0 0.0
    %322 = vmatmul.mubr.f32.gmra.mxu0 %v140
    %v323 = vpop.f32.mrf.mxu0
    %v324 = vadd.f32 0.0, %v323
    %v325 = vpop.f32.mrf.mxu0
    %326 = vmatprep.mubr.f32.mxu0 0.0
    %327 = vmatmul.mubr.f32.gmra.mxu0 %v143
    %v328 = vpop.f32.mrf.mxu0
    %v329 = vadd.f32 0.0, %v328
    %v330 = vpop.f32.mrf.mxu0
    %331 = vmatprep.mubr.f32.mxu0 0.0
    %332 = vmatmul.mubr.f32.gmra.mxu0 %v146
    %v333 = vpop.f32.mrf.mxu0
    %v334 = vadd.f32 0.0, %v333
    %v335 = vpop.f32.mrf.mxu0
    %336 = vmatprep.mubr.f32.mxu0 0.0
    %337 = vmatmul.mubr.f32.gmra.mxu0 %v149
    %v338 = vpop.f32.mrf.mxu0
    %v339 = vadd.f32 0.0, %v338
    %v340 = vpop.f32.mrf.mxu0
    %341 = vmatprep.mubr.f32.mxu0 0.0
    %342 = vmatmul.mubr.f32.gmra.mxu0 %v152
    %v343 = vpop.f32.mrf.mxu0
    %v344 = vadd.f32 0.0, %v343
    %v345 = vpop.f32.mrf.mxu0
    %346 = vmatprep.mubr.f32.mxu0 0.0
    %347 = vmatmul.mubr.f32.gmra.mxu0 %v155
    %v348 = vpop.f32.mrf.mxu0
    %v349 = vadd.f32 0.0, %v348
    %v350 = vpop.f32.mrf.mxu0
    %351 = vmatprep.mubr.f32.mxu0 0.0
    %352 = vmatmul.mubr.f32.gmra.mxu0 %v158
    %v353 = vpop.f32.mrf.mxu0
    %v354 = vadd.f32 0.0, %v353
    %v355 = vpop.f32.mrf.mxu0
    %356 = vmatprep.mubr.f32.mxu0 0.0
    %357 = vmatmul.mubr.f32.gmra.mxu0 %v161
    %v358 = vpop.f32.mrf.mxu0
    %v359 = vadd.f32 0.0, %v358
    %v360 = vpop.f32.mrf.mxu0
    %361 = vmatprep.mubr.f32.mxu0 0.0
    %362 = vmatmul.mubr.f32.gmra.mxu0 %v164
    %v363 = vpop.f32.mrf.mxu0
    %v364 = vadd.f32 0.0, %v363
    %v365 = vpop.f32.mrf.mxu0
    %366 = vmatprep.mubr.f32.mxu0 0.0
    %367 = vmatmul.mubr.f32.gmra.mxu0 %v167
    %v368 = vpop.f32.mrf.mxu0
    %v369 = vadd.f32 0.0, %v368
    %v370 = vpop.f32.mrf.mxu0
    %371 = vmatprep.mubr.f32.mxu0 0.0
    %372 = vmatmul.mubr.f32.gmra.mxu0 %v170
    %v373 = vpop.f32.mrf.mxu0
    %v374 = vadd.f32 0.0, %v373
    %v375 = vpop.f32.mrf.mxu0
    %376 = vmatprep.mubr.f32.mxu0 0.0
    %377 = vmatmul.mubr.f32.gmra.mxu0 %v173
    %v378 = vpop.f32.mrf.mxu0
    %v379 = vadd.f32 0.0, %v378
    %v380 = vpop.f32.mrf.mxu0
    %381 = vmatprep.mubr.f32.mxu0 0.0
    %382 = vmatmul.mubr.f32.gmra.mxu0 %v176
    %v383 = vpop.f32.mrf.mxu0
    %v384 = vadd.f32 0.0, %v383
    %v385 = vpop.f32.mrf.mxu0
    %386 = vmatprep.mubr.f32.mxu0 0.0
    %387 = vmatmul.mubr.f32.gmra.mxu0 %v179
    %v388 = vpop.f32.mrf.mxu0
    %v389 = vadd.f32 0.0, %v388
    %v390 = vpop.f32.mrf.mxu0
    %391 = vmatprep.mubr.f32.mxu0 0.0
    %392 = vmatmul.mubr.f32.gmra.mxu0 %v182
    %v393 = vpop.f32.mrf.mxu0
    %v394 = vadd.f32 0.0, %v393
    %v395 = vpop.f32.mrf.mxu0
    %396 = vmatprep.mubr.f32.mxu0 0.0
    %397 = vmatmul.mubr.f32.gmra.mxu0 %v185
    %v398 = vpop.f32.mrf.mxu0
    %v399 = vadd.f32 0.0, %v398
    %v400 = vpop.f32.mrf.mxu0
    %401 = vmatprep.mubr.f32.mxu0 0.0
    %402 = vmatmul.mubr.f32.gmra.mxu0 %v188
    %v403 = vpop.f32.mrf.mxu0
    %v404 = vadd.f32 0.0, %v403
    %v405 = vpop.f32.mrf.mxu0
    %406 = vmatprep.mubr.f32.mxu0 0.0
    %407 = vmatmul.mubr.f32.gmra.mxu0 %v191
    %v408 = vpop.f32.mrf.mxu0
    %v409 = vadd.f32 0.0, %v408
    %v410 = vpop.f32.mrf.mxu0
    %411 = vmatprep.mubr.f32.mxu0 0.0
    %412 = vmatmul.mubr.f32.gmra.mxu0 %v194
    %v413 = vpop.f32.mrf.mxu0
    %v414 = vadd.f32 0.0, %v413
    %v415 = vpop.f32.mrf.mxu0
    %416 = vmatprep.mubr.f32.mxu0 0.0
    %417 = vmatmul.mubr.f32.gmra.mxu0 %v197
    %v418 = vpop.f32.mrf.mxu0
    %v419 = vadd.f32 0.0, %v418
    %v420 = vpop.f32.mrf.mxu0
    %421 = vmatprep.mubr.f32.mxu0 0.0
    %422 = vmatmul.mubr.f32.gmra.mxu0 %v200
    %v423 = vpop.f32.mrf.mxu0
    %v424 = vadd.f32 0.0, %v423
    %v425 = vpop.f32.mrf.mxu0
    %426 = vdwg.mxu0
    %v427 = vld [vmem:[#allocation2] sm:$0xff]
    %v428 = vld [vmem:[#allocation2 + $0x8] sm:$0xff]
    %v429 = vld [vmem:[#allocation2 + $0x10] sm:$0xff]
    %v430 = vld [vmem:[#allocation2 + $0x18] sm:$0xff]
    %v431 = vld [vmem:[#allocation2 + $0x20] sm:$0xff]
    %v432 = vld [vmem:[#allocation2 + $0x28] sm:$0xff]
    %v433 = vld [vmem:[#allocation2 + $0x30] sm:$0xff]
    %v434 = vld [vmem:[#allocation2 + $0x38] sm:$0xff]
    %v435 = vld [vmem:[#allocation2 + $0x40] sm:$0xff]
    %v436 = vld [vmem:[#allocation2 + $0x48] sm:$0xff]
    %v437 = vld [vmem:[#allocation2 + $0x50] sm:$0xff]
    %v438 = vld [vmem:[#allocation2 + $0x58] sm:$0xff]
    %v439 = vld [vmem:[#allocation2 + $0x60] sm:$0xff]
    %v440 = vld [vmem:[#allocation2 + $0x68] sm:$0xff]
    %v441 = vld [vmem:[#allocation2 + $0x70] sm:$0xff]
    %v442 = vld [vmem:[#allocation2 + $0x78] sm:$0xff]
    %v443 = vld [vmem:[#allocation2 + $0x80] sm:$0xff]
    %v444 = vld [vmem:[#allocation2 + $0x88] sm:$0xff]
    %v445 = vld [vmem:[#allocation2 + $0x90] sm:$0xff]
    %v446 = vld [vmem:[#allocation2 + $0x98] sm:$0xff]
    %v447 = vld [vmem:[#allocation2 + $0xa0] sm:$0xff]
    %v448 = vld [vmem:[#allocation2 + $0xa8] sm:$0xff]
    %v449 = vld [vmem:[#allocation2 + $0xb0] sm:$0xff]
    %v450 = vld [vmem:[#allocation2 + $0xb8] sm:$0xff]
    %v451 = vld [vmem:[#allocation2 + $0xc0] sm:$0xff]
    %v452 = vld [vmem:[#allocation2 + $0xc8] sm:$0xff]
    %v453 = vld [vmem:[#allocation2 + $0xd0] sm:$0xff]
    %v454 = vld [vmem:[#allocation2 + $0xd8] sm:$0xff]
    %v455 = vld [vmem:[#allocation2 + $0xe0] sm:$0xff]
    %v456 = vld [vmem:[#allocation2 + $0xe8] sm:$0xff]
    %v457 = vld [vmem:[#allocation2 + $0xf0] sm:$0xff]
    %v458 = vld [vmem:[#allocation2 + $0xf8] sm:$0xff]
    %v459 = vld [vmem:[#allocation3] sm:$0xff]
    %v460 = vld [vmem:[#allocation3 + $0x8] sm:$0xff]
    %v461 = vld [vmem:[#allocation3 + $0x10] sm:$0xff]
    %v462 = vld [vmem:[#allocation3 + $0x18] sm:$0xff]
    %v463 = vld [vmem:[#allocation3 + $0x20] sm:$0xff]
    %v464 = vld [vmem:[#allocation3 + $0x28] sm:$0xff]
    %v465 = vld [vmem:[#allocation3 + $0x30] sm:$0xff]
    %v466 = vld [vmem:[#allocation3 + $0x38] sm:$0xff]
    %v467 = vld [vmem:[#allocation3 + $0x40] sm:$0xff]
    %v468 = vld [vmem:[#allocation3 + $0x48] sm:$0xff]
    %v469 = vld [vmem:[#allocation3 + $0x50] sm:$0xff]
    %v470 = vld [vmem:[#allocation3 + $0x58] sm:$0xff]
    %v471 = vld [vmem:[#allocation3 + $0x60] sm:$0xff]
    %v472 = vld [vmem:[#allocation3 + $0x68] sm:$0xff]
    %v473 = vld [vmem:[#allocation3 + $0x70] sm:$0xff]
    %v474 = vld [vmem:[#allocation3 + $0x78] sm:$0xff]
    %v475 = vld [vmem:[#allocation3 + $0x80] sm:$0xff]
    %v476 = vld [vmem:[#allocation3 + $0x88] sm:$0xff]
    %v477 = vld [vmem:[#allocation3 + $0x90] sm:$0xff]
    %v478 = vld [vmem:[#allocation3 + $0x98] sm:$0xff]
    %v479 = vld [vmem:[#allocation3 + $0xa0] sm:$0xff]
    %v480 = vld [vmem:[#allocation3 + $0xa8] sm:$0xff]
    %v481 = vld [vmem:[#allocation3 + $0xb0] sm:$0xff]
    %v482 = vld [vmem:[#allocation3 + $0xb8] sm:$0xff]
    %v483 = vld [vmem:[#allocation3 + $0xc0] sm:$0xff]
    %v484 = vld [vmem:[#allocation3 + $0xc8] sm:$0xff]
    %v485 = vld [vmem:[#allocation3 + $0xd0] sm:$0xff]
    %v486 = vld [vmem:[#allocation3 + $0xd8] sm:$0xff]
    %v487 = vld [vmem:[#allocation3 + $0xe0] sm:$0xff]
    %v488 = vld [vmem:[#allocation3 + $0xe8] sm:$0xff]
    %v489 = vld [vmem:[#allocation3 + $0xf0] sm:$0xff]
    %v490 = vld [vmem:[#allocation3 + $0xf8] sm:$0xff]
    %v491 = vld [vmem:[#allocation3 + $0x100] sm:$0xff]
    %v492 = vld [vmem:[#allocation3 + $0x108] sm:$0xff]
    %v493 = vld [vmem:[#allocation3 + $0x110] sm:$0xff]
    %v494 = vld [vmem:[#allocation3 + $0x118] sm:$0xff]
    %v495 = vld [vmem:[#allocation3 + $0x120] sm:$0xff]
    %v496 = vld [vmem:[#allocation3 + $0x128] sm:$0xff]
    %v497 = vld [vmem:[#allocation3 + $0x130] sm:$0xff]
    %v498 = vld [vmem:[#allocation3 + $0x138] sm:$0xff]
    %v499 = vld [vmem:[#allocation3 + $0x140] sm:$0xff]
    %v500 = vld [vmem:[#allocation3 + $0x148] sm:$0xff]
    %v501 = vld [vmem:[#allocation3 + $0x150] sm:$0xff]
    %v502 = vld [vmem:[#allocation3 + $0x158] sm:$0xff]
    %v503 = vld [vmem:[#allocation3 + $0x160] sm:$0xff]
    %v504 = vld [vmem:[#allocation3 + $0x168] sm:$0xff]
    %v505 = vld [vmem:[#allocation3 + $0x170] sm:$0xff]
    %v506 = vld [vmem:[#allocation3 + $0x178] sm:$0xff]
    %v507 = vld [vmem:[#allocation3 + $0x180] sm:$0xff]
    %v508 = vld [vmem:[#allocation3 + $0x188] sm:$0xff]
    %v509 = vld [vmem:[#allocation3 + $0x190] sm:$0xff]
    %v510 = vld [vmem:[#allocation3 + $0x198] sm:$0xff]
    %v511 = vld [vmem:[#allocation3 + $0x1a0] sm:$0xff]
    %v512 = vld [vmem:[#allocation3 + $0x1a8] sm:$0xff]
    %v513 = vld [vmem:[#allocation3 + $0x1b0] sm:$0xff]
    %v514 = vld [vmem:[#allocation3 + $0x1b8] sm:$0xff]
    %v515 = vld [vmem:[#allocation3 + $0x1c0] sm:$0xff]
    %v516 = vld [vmem:[#allocation3 + $0x1c8] sm:$0xff]
    %v517 = vld [vmem:[#allocation3 + $0x1d0] sm:$0xff]
    %v518 = vld [vmem:[#allocation3 + $0x1d8] sm:$0xff]
    %v519 = vld [vmem:[#allocation3 + $0x1e0] sm:$0xff]
    %v520 = vld [vmem:[#allocation3 + $0x1e8] sm:$0xff]
    %v521 = vld [vmem:[#allocation3 + $0x1f0] sm:$0xff]
    %v522 = vld [vmem:[#allocation3 + $0x1f8] sm:$0xff]
    %523 = vmatprep.subr.mxu0 0.0
    %524 = vmatpush1.msra.mxu0 %v344
    %525 = vmatprep.subr.mxu0 0.0
    %526 = vmatpush1.msra.mxu0 %v339
    %527 = vmatprep.subr.mxu0 0.0
    %528 = vmatpush1.msra.mxu0 %v334
    %529 = vmatprep.subr.mxu0 0.0
    %530 = vmatpush1.msra.mxu0 %v329
    %531 = vmatprep.subr.mxu0 0.0
    %532 = vmatpush1.msra.mxu0 %v324
    %533 = vmatprep.subr.mxu0 0.0
    %534 = vmatpush1.msra.mxu0 %v319
    %535 = vmatprep.subr.mxu0 0.0
    %536 = vmatpush1.msra.mxu0 %v314
    %537 = vmatprep.subr.mxu0 0.0
    %538 = vmatpush1.msra.mxu0 %v309
    %539 = vmatprep.subr.mxu0 0.0
    %540 = vmatpush1.msra.mxu0 %v304
    %541 = vmatprep.subr.mxu0 0.0
    %542 = vmatpush1.msra.mxu0 %v299
    %543 = vmatprep.subr.mxu0 0.0
    %544 = vmatpush1.msra.mxu0 %v294
    %545 = vmatprep.subr.mxu0 0.0
    %546 = vmatpush1.msra.mxu0 %v289
    %547 = vmatprep.subr.mxu0 0.0
    %548 = vmatpush1.msra.mxu0 %v284
    %549 = vmatprep.subr.mxu0 0.0
    %550 = vmatpush1.msra.mxu0 %v279
    %551 = vmatprep.subr.mxu0 0.0
    %552 = vmatpush1.msra.mxu0 %v274
    %553 = vmatprep.subr.mxu0 0.0
    %554 = vmatpush1.msra.mxu0 %v269
    %555 = vmatprep.subr.mxu0 0.0
    %556 = vmatpush2.msra.mxu0 %v424
    %557 = vmatprep.subr.mxu0 0.0
    %558 = vmatpush2.msra.mxu0 %v419
    %559 = vmatprep.subr.mxu0 0.0
    %560 = vmatpush2.msra.mxu0 %v414
    %561 = vmatprep.subr.mxu0 0.0
    %562 = vmatpush2.msra.mxu0 %v409
    %563 = vmatprep.subr.mxu0 0.0
    %564 = vmatpush2.msra.mxu0 %v404
    %565 = vmatprep.subr.mxu0 0.0
    %566 = vmatpush2.msra.mxu0 %v399
    %567 = vmatprep.subr.mxu0 0.0
    %568 = vmatpush2.msra.mxu0 %v394
    %569 = vmatprep.subr.mxu0 0.0
    %570 = vmatpush2.msra.mxu0 %v389
    %571 = vmatprep.subr.mxu0 0.0
    %572 = vmatpush2.msra.mxu0 %v384
    %573 = vmatprep.subr.mxu0 0.0
    %574 = vmatpush2.msra.mxu0 %v379
    %575 = vmatprep.subr.mxu0 0.0
    %576 = vmatpush2.msra.mxu0 %v374
    %577 = vmatprep.subr.mxu0 0.0
    %578 = vmatpush2.msra.mxu0 %v369
    %579 = vmatprep.subr.mxu0 0.0
    %580 = vmatpush2.msra.mxu0 %v364
    %581 = vmatprep.subr.mxu0 0.0
    %582 = vmatpush2.msra.mxu0 %v359
    %583 = vmatprep.subr.mxu0 0.0
    %584 = vmatpush2.msra.mxu0 %v354
    %585 = vmatprep.subr.mxu0 0.0
    %586 = vmatpush2.msra.mxu0 %v349
    %587 = vmatprep.mubr.f32.mxu0 %v460
    %588 = vmatmul.mubr.f32.gmra.mxu0 %v459
    %v589 = vpop.f32.mrf.mxu0
    %v590 = vadd.f32 0.0, %v589
    %v591 = vpop.f32.mrf.mxu0
    %592 = vmatprep.mubr.f32.mxu0 %v462
    %593 = vmatmul.mubr.f32.gmra.mxu0 %v461
    %v594 = vpop.f32.mrf.mxu0
    %v595 = vadd.f32 0.0, %v594
    %v596 = vpop.f32.mrf.mxu0
    %597 = vmatprep.mubr.f32.mxu0 %v464
    %598 = vmatmul.mubr.f32.gmra.mxu0 %v463
    %v599 = vpop.f32.mrf.mxu0
    %v600 = vadd.f32 0.0, %v599
    %v601 = vpop.f32.mrf.mxu0
    %602 = vmatprep.mubr.f32.mxu0 %v466
    %603 = vmatmul.mubr.f32.gmra.mxu0 %v465
    %v604 = vpop.f32.mrf.mxu0
    %v605 = vadd.f32 0.0, %v604
    %v606 = vpop.f32.mrf.mxu0
    %607 = vmatprep.mubr.f32.mxu0 %v468
    %608 = vmatmul.mubr.f32.gmra.mxu0 %v467
    %v609 = vpop.f32.mrf.mxu0
    %v610 = vadd.f32 0.0, %v609
    %v611 = vpop.f32.mrf.mxu0
    %612 = vmatprep.mubr.f32.mxu0 %v470
    %613 = vmatmul.mubr.f32.gmra.mxu0 %v469
    %v614 = vpop.f32.mrf.mxu0
    %v615 = vadd.f32 0.0, %v614
    %v616 = vpop.f32.mrf.mxu0
    %617 = vmatprep.mubr.f32.mxu0 %v472
    %618 = vmatmul.mubr.f32.gmra.mxu0 %v471
    %v619 = vpop.f32.mrf.mxu0
    %v620 = vadd.f32 0.0, %v619
    %v621 = vpop.f32.mrf.mxu0
    %622 = vmatprep.mubr.f32.mxu0 %v474
    %623 = vmatmul.mubr.f32.gmra.mxu0 %v473
    %v624 = vpop.f32.mrf.mxu0
    %v625 = vadd.f32 0.0, %v624
    %v626 = vpop.f32.mrf.mxu0
    %627 = vmatprep.mubr.f32.mxu0 %v476
    %628 = vmatmul.mubr.f32.gmra.mxu0 %v475
    %v629 = vpop.f32.mrf.mxu0
    %v630 = vadd.f32 0.0, %v629
    %v631 = vpop.f32.mrf.mxu0
    %632 = vmatprep.mubr.f32.mxu0 %v478
    %633 = vmatmul.mubr.f32.gmra.mxu0 %v477
    %v634 = vpop.f32.mrf.mxu0
    %v635 = vadd.f32 0.0, %v634
    %v636 = vpop.f32.mrf.mxu0
    %637 = vmatprep.mubr.f32.mxu0 %v480
    %638 = vmatmul.mubr.f32.gmra.mxu0 %v479
    %v639 = vpop.f32.mrf.mxu0
    %v640 = vadd.f32 0.0, %v639
    %v641 = vpop.f32.mrf.mxu0
    %642 = vmatprep.mubr.f32.mxu0 %v482
    %643 = vmatmul.mubr.f32.gmra.mxu0 %v481
    %v644 = vpop.f32.mrf.mxu0
    %v645 = vadd.f32 0.0, %v644
    %v646 = vpop.f32.mrf.mxu0
    %647 = vmatprep.mubr.f32.mxu0 %v484
    %648 = vmatmul.mubr.f32.gmra.mxu0 %v483
    %v649 = vpop.f32.mrf.mxu0
    %v650 = vadd.f32 0.0, %v649
    %v651 = vpop.f32.mrf.mxu0
    %652 = vmatprep.mubr.f32.mxu0 %v486
    %653 = vmatmul.mubr.f32.gmra.mxu0 %v485
    %v654 = vpop.f32.mrf.mxu0
    %v655 = vadd.f32 0.0, %v654
    %v656 = vpop.f32.mrf.mxu0
    %657 = vmatprep.mubr.f32.mxu0 %v488
    %658 = vmatmul.mubr.f32.gmra.mxu0 %v487
    %v659 = vpop.f32.mrf.mxu0
    %v660 = vadd.f32 0.0, %v659
    %v661 = vpop.f32.mrf.mxu0
    %662 = vmatprep.mubr.f32.mxu0 %v490
    %663 = vmatmul.mubr.f32.gmra.mxu0 %v489
    %v664 = vpop.f32.mrf.mxu0
    %v665 = vadd.f32 0.0, %v664
    %v666 = vpop.f32.mrf.mxu0
    %667 = vmatprep.mubr.f32.mxu0 %v492
    %668 = vmatmul.mubr.f32.gmra.mxu0 %v491
    %v669 = vpop.f32.mrf.mxu0
    %v670 = vadd.f32 0.0, %v669
    %v671 = vpop.f32.mrf.mxu0
    %672 = vmatprep.mubr.f32.mxu0 %v494
    %673 = vmatmul.mubr.f32.gmra.mxu0 %v493
    %v674 = vpop.f32.mrf.mxu0
    %v675 = vadd.f32 0.0, %v674
    %v676 = vpop.f32.mrf.mxu0
    %677 = vmatprep.mubr.f32.mxu0 %v496
    %678 = vmatmul.mubr.f32.gmra.mxu0 %v495
    %v679 = vpop.f32.mrf.mxu0
    %v680 = vadd.f32 0.0, %v679
    %v681 = vpop.f32.mrf.mxu0
    %682 = vmatprep.mubr.f32.mxu0 %v498
    %683 = vmatmul.mubr.f32.gmra.mxu0 %v497
    %v684 = vpop.f32.mrf.mxu0
    %v685 = vadd.f32 0.0, %v684
    %v686 = vpop.f32.mrf.mxu0
    %687 = vmatprep.mubr.f32.mxu0 %v500
    %688 = vmatmul.mubr.f32.gmra.mxu0 %v499
    %v689 = vpop.f32.mrf.mxu0
    %v690 = vadd.f32 0.0, %v689
    %v691 = vpop.f32.mrf.mxu0
    %692 = vmatprep.mubr.f32.mxu0 %v502
    %693 = vmatmul.mubr.f32.gmra.mxu0 %v501
    %v694 = vpop.f32.mrf.mxu0
    %v695 = vadd.f32 0.0, %v694
    %v696 = vpop.f32.mrf.mxu0
    %697 = vmatprep.mubr.f32.mxu0 %v504
    %698 = vmatmul.mubr.f32.gmra.mxu0 %v503
    %v699 = vpop.f32.mrf.mxu0
    %v700 = vadd.f32 0.0, %v699
    %v701 = vpop.f32.mrf.mxu0
    %702 = vmatprep.mubr.f32.mxu0 %v506
    %703 = vmatmul.mubr.f32.gmra.mxu0 %v505
    %v704 = vpop.f32.mrf.mxu0
    %v705 = vadd.f32 0.0, %v704
    %v706 = vpop.f32.mrf.mxu0
    %707 = vmatprep.mubr.f32.mxu0 %v508
    %708 = vmatmul.mubr.f32.gmra.mxu0 %v507
    %v709 = vpop.f32.mrf.mxu0
    %v710 = vadd.f32 0.0, %v709
    %v711 = vpop.f32.mrf.mxu0
    %712 = vmatprep.mubr.f32.mxu0 %v510
    %713 = vmatmul.mubr.f32.gmra.mxu0 %v509
    %v714 = vpop.f32.mrf.mxu0
    %v715 = vadd.f32 0.0, %v714
    %v716 = vpop.f32.mrf.mxu0
    %717 = vmatprep.mubr.f32.mxu0 %v512
    %718 = vmatmul.mubr.f32.gmra.mxu0 %v511
    %v719 = vpop.f32.mrf.mxu0
    %v720 = vadd.f32 0.0, %v719
    %v721 = vpop.f32.mrf.mxu0
    %722 = vmatprep.mubr.f32.mxu0 %v514
    %723 = vmatmul.mubr.f32.gmra.mxu0 %v513
    %v724 = vpop.f32.mrf.mxu0
    %v725 = vadd.f32 0.0, %v724
    %v726 = vpop.f32.mrf.mxu0
    %727 = vmatprep.mubr.f32.mxu0 %v516
    %728 = vmatmul.mubr.f32.gmra.mxu0 %v515
    %v729 = vpop.f32.mrf.mxu0
    %v730 = vadd.f32 0.0, %v729
    %v731 = vpop.f32.mrf.mxu0
    %732 = vmatprep.mubr.f32.mxu0 %v518
    %733 = vmatmul.mubr.f32.gmra.mxu0 %v517
    %v734 = vpop.f32.mrf.mxu0
    %v735 = vadd.f32 0.0, %v734
    %v736 = vpop.f32.mrf.mxu0
    %737 = vmatprep.mubr.f32.mxu0 %v520
    %738 = vmatmul.mubr.f32.gmra.mxu0 %v519
    %v739 = vpop.f32.mrf.mxu0
    %v740 = vadd.f32 0.0, %v739
    %v741 = vpop.f32.mrf.mxu0
    %742 = vmatprep.mubr.f32.mxu0 %v522
    %743 = vmatmul.mubr.f32.gmra.mxu0 %v521
    %v744 = vpop.f32.mrf.mxu0
    %v745 = vadd.f32 0.0, %v744
    %v746 = vpop.f32.mrf.mxu0
    %747 = vdwg.mxu0
    %v748 = vadd.f32 %v427, %v590
    %v749 = vadd.f32 %v428, %v595
    %v750 = vadd.f32 %v429, %v600
    %v751 = vadd.f32 %v430, %v605
    %v752 = vadd.f32 %v431, %v610
    %v753 = vadd.f32 %v432, %v615
    %v754 = vadd.f32 %v433, %v620
    %v755 = vadd.f32 %v434, %v625
    %v756 = vadd.f32 %v435, %v630
    %v757 = vadd.f32 %v436, %v635
    %v758 = vadd.f32 %v437, %v640
    %v759 = vadd.f32 %v438, %v645
    %v760 = vadd.f32 %v439, %v650
    %v761 = vadd.f32 %v440, %v655
    %v762 = vadd.f32 %v441, %v660
    %v763 = vadd.f32 %v442, %v665
    %v764 = vadd.f32 %v443, %v670
    %v765 = vadd.f32 %v444, %v675
    %v766 = vadd.f32 %v445, %v680
    %v767 = vadd.f32 %v446, %v685
    %v768 = vadd.f32 %v447, %v690
    %v769 = vadd.f32 %v448, %v695
    %v770 = vadd.f32 %v449, %v700
    %v771 = vadd.f32 %v450, %v705
    %v772 = vadd.f32 %v451, %v710
    %v773 = vadd.f32 %v452, %v715
    %v774 = vadd.f32 %v453, %v720
    %v775 = vadd.f32 %v454, %v725
    %v776 = vadd.f32 %v455, %v730
    %v777 = vadd.f32 %v456, %v735
    %v778 = vadd.f32 %v457, %v740
    %v779 = vadd.f32 %v458, %v745
    %780 = vst [vmem:[#allocation2] sm:$0xff] %v748
    %781 = vst [vmem:[#allocation2 + $0x8] sm:$0xff] %v749
    %782 = vst [vmem:[#allocation2 + $0x10] sm:$0xff] %v750
    %783 = vst [vmem:[#allocation2 + $0x18] sm:$0xff] %v751
    %784 = vst [vmem:[#allocation2 + $0x20] sm:$0xff] %v752
    %785 = vst [vmem:[#allocation2 + $0x28] sm:$0xff] %v753
    %786 = vst [vmem:[#allocation2 + $0x30] sm:$0xff] %v754
    %787 = vst [vmem:[#allocation2 + $0x38] sm:$0xff] %v755
    %788 = vst [vmem:[#allocation2 + $0x40] sm:$0xff] %v756
    %789 = vst [vmem:[#allocation2 + $0x48] sm:$0xff] %v757
    %790 = vst [vmem:[#allocation2 + $0x50] sm:$0xff] %v758
    %791 = vst [vmem:[#allocation2 + $0x58] sm:$0xff] %v759
    %792 = vst [vmem:[#allocation2 + $0x60] sm:$0xff] %v760
    %793 = vst [vmem:[#allocation2 + $0x68] sm:$0xff] %v761
    %794 = vst [vmem:[#allocation2 + $0x70] sm:$0xff] %v762
    %795 = vst [vmem:[#allocation2 + $0x78] sm:$0xff] %v763
    %796 = vst [vmem:[#allocation2 + $0x80] sm:$0xff] %v764
    %797 = vst [vmem:[#allocation2 + $0x88] sm:$0xff] %v765
    %798 = vst [vmem:[#allocation2 + $0x90] sm:$0xff] %v766
    %799 = vst [vmem:[#allocation2 + $0x98] sm:$0xff] %v767
    %800 = vst [vmem:[#allocation2 + $0xa0] sm:$0xff] %v768
    %801 = vst [vmem:[#allocation2 + $0xa8] sm:$0xff] %v769
    %802 = vst [vmem:[#allocation2 + $0xb0] sm:$0xff] %v770
    %803 = vst [vmem:[#allocation2 + $0xb8] sm:$0xff] %v771
    %804 = vst [vmem:[#allocation2 + $0xc0] sm:$0xff] %v772
    %805 = vst [vmem:[#allocation2 + $0xc8] sm:$0xff] %v773
    %806 = vst [vmem:[#allocation2 + $0xd0] sm:$0xff] %v774
    %807 = vst [vmem:[#allocation2 + $0xd8] sm:$0xff] %v775
    %808 = vst [vmem:[#allocation2 + $0xe0] sm:$0xff] %v776
    %809 = vst [vmem:[#allocation2 + $0xe8] sm:$0xff] %v777
    %810 = vst [vmem:[#allocation2 + $0xf0] sm:$0xff] %v778
    %811 = vst [vmem:[#allocation2 + $0xf8] sm:$0xff] %v779
    // Predicated region
    $region22: #{tpu_custom_call.1} parent=1 // pred_check
      %p812 = pneg %p29
    $region23: #{tpu_custom_call.1} parent=1 // pred_check_branch
      %814 = sbr.rel (%p812) target = $region25
    $region24: #{tpu_custom_call.1} parent=1 // pred_region
      %v815 = vld [vmem:[#allocation2] sm:$0xff]
      %v816 = vld [vmem:[#allocation2 + $0x8] sm:$0xff]
      %v817 = vld [vmem:[#allocation2 + $0x10] sm:$0xff]
      %v818 = vld [vmem:[#allocation2 + $0x18] sm:$0xff]
      %v819 = vld [vmem:[#allocation2 + $0x20] sm:$0xff]
      %v820 = vld [vmem:[#allocation2 + $0x28] sm:$0xff]
      %v821 = vld [vmem:[#allocation2 + $0x30] sm:$0xff]
      %v822 = vld [vmem:[#allocation2 + $0x38] sm:$0xff]
      %v823 = vld [vmem:[#allocation2 + $0x40] sm:$0xff]
      %v824 = vld [vmem:[#allocation2 + $0x48] sm:$0xff]
      %v825 = vld [vmem:[#allocation2 + $0x50] sm:$0xff]
      %v826 = vld [vmem:[#allocation2 + $0x58] sm:$0xff]
      %v827 = vld [vmem:[#allocation2 + $0x60] sm:$0xff]
      %v828 = vld [vmem:[#allocation2 + $0x68] sm:$0xff]
      %v829 = vld [vmem:[#allocation2 + $0x70] sm:$0xff]
      %v830 = vld [vmem:[#allocation2 + $0x78] sm:$0xff]
      %v831 = vld [vmem:[#allocation2 + $0x80] sm:$0xff]
      %v832 = vld [vmem:[#allocation2 + $0x88] sm:$0xff]
      %v833 = vld [vmem:[#allocation2 + $0x90] sm:$0xff]
      %v834 = vld [vmem:[#allocation2 + $0x98] sm:$0xff]
      %v835 = vld [vmem:[#allocation2 + $0xa0] sm:$0xff]
      %v836 = vld [vmem:[#allocation2 + $0xa8] sm:$0xff]
      %v837 = vld [vmem:[#allocation2 + $0xb0] sm:$0xff]
      %v838 = vld [vmem:[#allocation2 + $0xb8] sm:$0xff]
      %v839 = vld [vmem:[#allocation2 + $0xc0] sm:$0xff]
      %v840 = vld [vmem:[#allocation2 + $0xc8] sm:$0xff]
      %v841 = vld [vmem:[#allocation2 + $0xd0] sm:$0xff]
      %v842 = vld [vmem:[#allocation2 + $0xd8] sm:$0xff]
      %v843 = vld [vmem:[#allocation2 + $0xe0] sm:$0xff]
      %v844 = vld [vmem:[#allocation2 + $0xe8] sm:$0xff]
      %v845 = vld [vmem:[#allocation2 + $0xf0] sm:$0xff]
      %v846 = vld [vmem:[#allocation2 + $0xf8] sm:$0xff]
      %847 = vst [vmem:[#allocation6] sm:$0xff] %v815
      %848 = vst [vmem:[#allocation6 + $0x8] sm:$0xff] %v816
      %849 = vst [vmem:[#allocation6 + $0x10] sm:$0xff] %v817
      %850 = vst [vmem:[#allocation6 + $0x18] sm:$0xff] %v818
      %851 = vst [vmem:[#allocation6 + $0x20] sm:$0xff] %v819
      %852 = vst [vmem:[#allocation6 + $0x28] sm:$0xff] %v820
      %853 = vst [vmem:[#allocation6 + $0x30] sm:$0xff] %v821
      %854 = vst [vmem:[#allocation6 + $0x38] sm:$0xff] %v822
      %855 = vst [vmem:[#allocation6 + $0x40] sm:$0xff] %v823
      %856 = vst [vmem:[#allocation6 + $0x48] sm:$0xff] %v824
      %857 = vst [vmem:[#allocation6 + $0x50] sm:$0xff] %v825
      %858 = vst [vmem:[#allocation6 + $0x58] sm:$0xff] %v826
      %859 = vst [vmem:[#allocation6 + $0x60] sm:$0xff] %v827
      %860 = vst [vmem:[#allocation6 + $0x68] sm:$0xff] %v828
      %861 = vst [vmem:[#allocation6 + $0x70] sm:$0xff] %v829
      %862 = vst [vmem:[#allocation6 + $0x78] sm:$0xff] %v830
      %863 = vst [vmem:[#allocation6 + $0x80] sm:$0xff] %v831
      %864 = vst [vmem:[#allocation6 + $0x88] sm:$0xff] %v832
      %865 = vst [vmem:[#allocation6 + $0x90] sm:$0xff] %v833
      %866 = vst [vmem:[#allocation6 + $0x98] sm:$0xff] %v834
      %867 = vst [vmem:[#allocation6 + $0xa0] sm:$0xff] %v835
      %868 = vst [vmem:[#allocation6 + $0xa8] sm:$0xff] %v836
      %869 = vst [vmem:[#allocation6 + $0xb0] sm:$0xff] %v837
      %870 = vst [vmem:[#allocation6 + $0xb8] sm:$0xff] %v838
      %871 = vst [vmem:[#allocation6 + $0xc0] sm:$0xff] %v839
      %872 = vst [vmem:[#allocation6 + $0xc8] sm:$0xff] %v840
      %873 = vst [vmem:[#allocation6 + $0xd0] sm:$0xff] %v841
      %874 = vst [vmem:[#allocation6 + $0xd8] sm:$0xff] %v842
      %875 = vst [vmem:[#allocation6 + $0xe0] sm:$0xff] %v843
      %876 = vst [vmem:[#allocation6 + $0xe8] sm:$0xff] %v844
      %877 = vst [vmem:[#allocation6 + $0xf0] sm:$0xff] %v845
      %878 = vst [vmem:[#allocation6 + $0xf8] sm:$0xff] %v846
    $region25: #{tpu_custom_call.1} parent=1 // pred_fallthru
      _
    // Predicated region
    $region26: #{tpu_custom_call.1} parent=1 // pred_check
      _
    $region27: #{tpu_custom_call.1} parent=1 // pred_check_branch
      %880 = sbr.rel (0) target = $region29
    $region28: #{tpu_custom_call.1} parent=1 // pred_region
      %s882 = ssub.s32 4096, 4096
      %883 = vsyncadd [#allocation5], %s882
      %s884 = sshll.u32 [#allocation6], 4
      %s885 = int_to_ptr.vmem [resolvable:$true] %s884
      %890 = dma.vmem_to_hbm [thread:$0]  %s885, 4096, %s3, [#allocation5], 128, 128, 8
    $region29: #{tpu_custom_call.1} parent=1 // pred_fallthru
      _
    // Predicated region
    $region30: #{tpu_custom_call.1} parent=1 // pred_check
      _
    $region31: #{tpu_custom_call.1} parent=1 // pred_check_branch
      %892 = sbr.rel (0) target = $region33
    $region32: #{tpu_custom_call.1} parent=1 // pred_region
      %893 = dma.done [#allocation5], 4096
    $region33: #{tpu_custom_call.1} parent=1 // pred_fallthru
      _
    %894 = vsyncpa [#allocation4], 1
    %895 = vsyncpa [#allocation5], 1

</llo_original>
